<compile_context>
chip_gen: v7x
topology: tpu7x:2x2x1
jax: 0.10.0
libtpu: 0.0.40
codegen_flags: <defaults>
</compile_context>

<pallas_src>
import jax
import jax.numpy as jnp
from jax.experimental import pallas as pl
from jax.experimental.pallas import tpu as pltpu


def lgm_linear_kernel(x_ref, mu_ref, xxh_ref, yyh_ref, o_ref, xy_acc):
    # x_ref  : (tb, tk)   input batch tile
    # mu_ref : (tn, tk)   mu tile, native (out, in) layout (no transpose)
    # xxh_ref: (tb, 1)    precomputed -0.5 * ||x_i||^2 (f32)
    # yyh_ref: (1, tn)    precomputed -0.5 * ||mu_j||^2 (f32)
    # o_ref  : (tb, tn)   output tile
    # xy_acc : (tb, tn)   f32 scratch accumulator (persists across K steps)
    k = pl.program_id(2)

    @pl.when(k == 0)
    def _():
        xy_acc[...] = jnp.zeros_like(xy_acc)

    # MXU: contract the feature dim of both operands; mu consumed as-is.
    xy_acc[...] += jax.lax.dot_general(
        x_ref[...], mu_ref[...], (((1,), (1,)), ((), ())),
        preferred_element_type=jnp.float32,
    )

    @pl.when(k == pl.num_programs(2) - 1)
    def _():
        out = xy_acc[...] + xxh_ref[...] + yyh_ref[...]
        o_ref[...] = out.astype(o_ref.dtype)


def _round_up(x, m):
    return ((x + m - 1) // m) * m


def _pick_tile(dim, preferred, align, min_tile):
    """Choose (tile, padded_dim).

    tile is a multiple of `align`, <= `preferred` (unless dim itself is
    smaller once aligned); padded_dim is a multiple of tile.  Prefers an
    exact divisor of the aligned dim down to `min_tile` (avoids MXU-underfill
    tiny tiles); otherwise pads the dim up to a full preferred-sized tile.
    """
    dim_a = _round_up(dim, align)
    if dim_a <= preferred:
        return dim_a, dim_a
    t = (preferred // align) * align
    while t >= min_tile:
        if dim_a % t == 0:
            return t, dim_a
        t -= align
    t = (preferred // align) * align
    return t, _round_up(dim, t)


def lgm_linear(x, mu, *, tb=None, tn=None, tk=None, matmul_dtype=None):
    """Pallas implementation of LGM_Linear.forward.

    x : (B, in_features)
    mu: (out_features, in_features)
    matmul_dtype: optional operand dtype for the MXU (e.g. jnp.bfloat16 on
                  v6e/v7x when the accuracy budget allows); accumulation and
                  the norm terms stay f32.
    returns (B, out_features), dtype of x
    """
    B, K = x.shape
    N, K_mu = mu.shape
    assert K == K_mu
    out_dtype = x.dtype

    # Tile selection: lane/MXU aligned, big enough to amortize per-step
    # overhead and cut HBM re-reads, small enough for a 32 MiB scoped VMEM
    # budget on every TPU generation (v5e/v6e/v7x).
    if tb is None:
        tb, B_p = _pick_tile(B, 512, 8, 128)
    else:
        B_p = _round_up(B, tb)
    if tn is None:
        tn, N_p = _pick_tile(N, 512, 128, 128)
    else:
        N_p = _round_up(N, tn)
    if tk is None:
        tk, K_p = _pick_tile(K, 1024, 128, 256)
    else:
        K_p = _round_up(K, tk)

    # Hoisted epilogue constants (computed from the original f32 values so
    # precision is independent of any operand downcast).
    xf = x.astype(jnp.float32)
    muf = mu.astype(jnp.float32)
    xx_half = -0.5 * jnp.sum(xf * xf, axis=1, keepdims=True)      # (B, 1)
    yy_half = (-0.5 * jnp.sum(muf * muf, axis=1)).reshape(1, N)   # (1, N)

    # Optional operand downcast for MXU throughput (bf16 on v6e/v7x).
    if matmul_dtype is not None:
        x_op = x.astype(matmul_dtype)
        mu_op = mu.astype(matmul_dtype)
    else:
        x_op, mu_op = x, mu

    # Zero-pad to tile multiples (zeros are neutral for the matmul and the
    # squared norms); padded rows/cols are sliced off at the end.  Keeps the
    # output lane-dense (>=128 wide stores).
    if (B_p, K_p) != (B, K):
        x_op = jnp.pad(x_op, ((0, B_p - B), (0, K_p - K)))
    if (N_p, K_p) != (N, K):
        mu_op = jnp.pad(mu_op, ((0, N_p - N), (0, K_p - K)))
    if B_p != B:
        xx_half = jnp.pad(xx_half, ((0, B_p - B), (0, 0)))
    if N_p != N:
        yy_half = jnp.pad(yy_half, ((0, 0), (0, N_p - N)))

    grid = (B_p // tb, N_p // tn, K_p // tk)

    out = pl.pallas_call(
        lgm_linear_kernel,
        out_shape=jax.ShapeDtypeStruct((B_p, N_p), out_dtype),
        grid_spec=pltpu.PrefetchScalarGridSpec(
            num_scalar_prefetch=0,
            grid=grid,
            in_specs=[
                # batch-tile i, K-tile k of the input
                pl.BlockSpec((tb, tk), lambda i, j, k: (i, k)),
                # out-tile j, K-tile k of mu (native layout, no transpose)
                pl.BlockSpec((tn, tk), lambda i, j, k: (j, k)),
                # precomputed -0.5*||x||^2 for batch-tile i
                pl.BlockSpec((tb, 1), lambda i, j, k: (i, 0)),
                # precomputed -0.5*||mu||^2 for out-tile j
                pl.BlockSpec((1, tn), lambda i, j, k: (0, j)),
            ],
            out_specs=pl.BlockSpec((tb, tn), lambda i, j, k: (i, j)),
            scratch_shapes=[pltpu.VMEM((tb, tn), jnp.float32)],
        ),
        compiler_params=pltpu.CompilerParams(
            dimension_semantics=("parallel", "parallel", "arbitrary"),
            vmem_limit_bytes=32 * 1024 * 1024,
        ),
    )(x_op, mu_op, xx_half, yy_half)

    if (B_p, N_p) != (B, N):
        out = out[:B, :N]
    return out


def lgm_linear_ref(x, mu):
    xf = x.astype(jnp.float32)
    muf = mu.astype(jnp.float32)
    xy = xf @ muf.T
    xx = jnp.sum(xf * xf, axis=1, keepdims=True)
    yy = jnp.sum(muf * muf, axis=1, keepdims=True).T
    return (-0.5 * (xx - 2.0 * xy + yy)).astype(x.dtype)


if __name__ == "__main__":
    key = jax.random.PRNGKey(0)
    kx, kmu = jax.random.split(key)

    B = 8
    in_features = 32
    out_features = 16

    x = jax.random.normal(kx, (B, in_features), dtype=jnp.float32)
    # Deterministic parameter init (stands in for nn.Parameter(torch.empty(...)))
    mu = jax.random.normal(kmu, (out_features, in_features), dtype=jnp.float32) * 0.1

    out = lgm_linear(x, mu)
    out = jax.block_until_ready(out)

    ref = lgm_linear_ref(x, mu)
    assert out.shape == (B, out_features)
    assert jnp.allclose(out, ref, atol=1e-5, rtol=1e-5), "mismatch vs reference"

    print("KERNEL_OK")
</pallas_src>

<mosaic_0001>
module attributes {stable_mosaic.version = 11 : i64} {
  func.func @lgm_linear_kernel(%arg0: i32, %arg1: i32, %arg2: i32, %arg3: memref<8x128xf32, #tpu.memory_space<vmem>>, %arg4: memref<128x128xf32, #tpu.memory_space<vmem>>, %arg5: memref<8x1xf32, #tpu.memory_space<vmem>>, %arg6: memref<1x128xf32, #tpu.memory_space<vmem>>, %arg7: memref<8x128xf32, #tpu.memory_space<vmem>>, %arg8: memref<8x128xf32, #tpu.memory_space<vmem>>) attributes {dimension_semantics = [#tpu.dimension_semantics<parallel>, #tpu.dimension_semantics<parallel>, #tpu.dimension_semantics<arbitrary>], iteration_bounds = array<i64: 1, 1, 1>, scalar_prefetch = 0 : i64, scratch_operands = 1 : i64, tpu.core_type = #tpu.core_type<tc>, window_params = [{transform_indices = @transform_0, window_bounds = array<i64: 8, 128>}, {transform_indices = @transform_1, window_bounds = array<i64: 128, 128>}, {transform_indices = @transform_2, window_bounds = array<i64: 8, 1>}, {transform_indices = @transform_3, window_bounds = array<i64: 1, 128>}, {transform_indices = @transform_4, window_bounds = array<i64: 8, 128>}]} {
    %c0_i32 = arith.constant 0 : i32
    %0 = arith.cmpi eq, %arg2, %c0_i32 : i32
    %1 = arith.extui %0 : i1 to i32
    %c0_i32_0 = arith.constant 0 : i32
    %2 = arith.cmpi ne, %1, %c0_i32_0 : i32
    scf.if %2 {
      %cst_10 = arith.constant 0.000000e+00 : f32
      %12 = vector.broadcast %cst_10 : f32 to vector<8x128xf32>
      %c0_11 = arith.constant 0 : index
      %c0_12 = arith.constant 0 : index
      %13 = vector.load %arg8[%c0_11, %c0_12] : memref<8x128xf32, #tpu.memory_space<vmem>>, vector<8x128xf32>
      tpu.vector_store %arg8[%c0_11, %c0_12], %12 {strides = array<i32>} : memref<8x128xf32, #tpu.memory_space<vmem>>, vector<8x128xf32>,
    } else {
    }
    %c0 = arith.constant 0 : index
    %c0_1 = arith.constant 0 : index
    %3 = vector.load %arg8[%c0, %c0_1] : memref<8x128xf32, #tpu.memory_space<vmem>>, vector<8x128xf32>
    %c0_2 = arith.constant 0 : index
    %c0_3 = arith.constant 0 : index
    %4 = vector.load %arg3[%c0_2, %c0_3] : memref<8x128xf32, #tpu.memory_space<vmem>>, vector<8x128xf32>
    %c0_4 = arith.constant 0 : index
    %c0_5 = arith.constant 0 : index
    %5 = vector.load %arg4[%c0_4, %c0_5] : memref<128x128xf32, #tpu.memory_space<vmem>>, vector<128x128xf32>
    %cst = arith.constant dense<0.000000e+00> : vector<8x128xf32>
    %6 = tpu.matmul %4, %5, %cst {dimension_numbers = #tpu.dot_dimension_numbers<[1], [1], [0], [0], [0, 0, 1, 0], [], []>} : vector<8x128xf32>, vector<128x128xf32>, vector<8x128xf32> -> vector<8x128xf32>
    %7 = arith.addf %3, %6 : vector<8x128xf32>
    %c0_6 = arith.constant 0 : index
    %c0_7 = arith.constant 0 : index
    %8 = vector.load %arg8[%c0_6, %c0_7] : memref<8x128xf32, #tpu.memory_space<vmem>>, vector<8x128xf32>
    tpu.vector_store %arg8[%c0_6, %c0_7], %7 {strides = array<i32>} : memref<8x128xf32, #tpu.memory_space<vmem>>, vector<8x128xf32>,
    %c0_i32_8 = arith.constant 0 : i32
    %9 = arith.cmpi eq, %arg2, %c0_i32_8 : i32
    %10 = arith.extui %9 : i1 to i32
    %c0_i32_9 = arith.constant 0 : i32
    %11 = arith.cmpi ne, %10, %c0_i32_9 : i32
    scf.if %11 {
      %c0_10 = arith.constant 0 : index
      %c0_11 = arith.constant 0 : index
      %12 = vector.load %arg8[%c0_10, %c0_11] : memref<8x128xf32, #tpu.memory_space<vmem>>, vector<8x128xf32>
      %c0_12 = arith.constant 0 : index
      %c0_13 = arith.constant 0 : index
      %13 = vector.load %arg5[%c0_12, %c0_13] : memref<8x1xf32, #tpu.memory_space<vmem>>, vector<8x1xf32>
      %14 = vector.broadcast %13 : vector<8x1xf32> to vector<8x128xf32>
      %15 = arith.addf %12, %14 : vector<8x128xf32>
      %c0_14 = arith.constant 0 : index
      %c0_15 = arith.constant 0 : index
      %16 = vector.load %arg6[%c0_14, %c0_15] : memref<1x128xf32, #tpu.memory_space<vmem>>, vector<1x128xf32>
      %17 = vector.broadcast %16 : vector<1x128xf32> to vector<8x128xf32>
      %18 = arith.addf %15, %17 : vector<8x128xf32>
      %c0_16 = arith.constant 0 : index
      %c0_17 = arith.constant 0 : index
      %19 = vector.load %arg7[%c0_16, %c0_17] : memref<8x128xf32, #tpu.memory_space<vmem>>, vector<8x128xf32>
      tpu.vector_store %arg7[%c0_16, %c0_17], %18 {strides = array<i32>} : memref<8x128xf32, #tpu.memory_space<vmem>>, vector<8x128xf32>,
    } else {
    }
    return
  }
  func.func @transform_0(%arg0: i32, %arg1: i32, %arg2: i32) -> (i32, i32) {
    %c0_i32 = arith.constant 0 : i32
    return %arg0, %arg2 : i32, i32
  }
  func.func @transform_1(%arg0: i32, %arg1: i32, %arg2: i32) -> (i32, i32) {
    %c0_i32 = arith.constant 0 : i32
    return %arg1, %arg2 : i32, i32
  }
  func.func @transform_2(%arg0: i32, %arg1: i32, %arg2: i32) -> (i32, i32) {
    %c0_i32 = arith.constant 0 : i32
    %c0_i32_0 = arith.constant 0 : i32
    return %arg0, %c0_i32 : i32, i32
  }
  func.func @transform_3(%arg0: i32, %arg1: i32, %arg2: i32) -> (i32, i32) {
    %c0_i32 = arith.constant 0 : i32
    %c0_i32_0 = arith.constant 0 : i32
    return %c0_i32, %arg1 : i32, i32
  }
  func.func @transform_4(%arg0: i32, %arg1: i32, %arg2: i32) -> (i32, i32) {
    %c0_i32 = arith.constant 0 : i32
    return %arg0, %arg1 : i32, i32
  }
}

</mosaic_0001>

<llo_original>
// kernel: tpu_custom_call.1
$region0: #{tpu_custom_call.1}
  #allocation0 [shape = 'u32[]', space=smem, size = 0x4, offset = 0x4, fixed_abs, tag = 'smem constant byte address 0x4 - core index']
  #allocation1 [shape = 'u32[144,128]{1,0:T(1,128)}', space=vmem, size = 0x12000, scoped, tag = 'internal scratch']
  #allocation2 [shape = 'f32[8,128]{1,0:T(8,128)}', space=vmem, size = 0x1000, scoped, tag = 'scratch operand']
  %s0 = inlined_call_operand.vmem [shape: f32[8,128], index: 0, kind: input, shape index: {}]
  %s1 = inlined_call_operand.hbm [shape: f32[128,128], index: 1, kind: input, shape index: {}]
  %s2 = inlined_call_operand.vmem [shape: f32[8,1], index: 2, kind: input, shape index: {}]
  %s3 = inlined_call_operand.vmem [shape: f32[1,128], index: 3, kind: input, shape index: {}]
  %s4 = inlined_call_operand.hbm [shape: f32[8,128], index: 4, kind: output, shape index: {}]
  %s5 = sld [smem:[#allocation0]]
  $region38: #{tpu_custom_call.1} parent=0
    _
  %s7 = ssub.s32 1, %s5
  %s8 = scalar_select 0, %s7, %s5
  $region1: #{tpu_custom_call.1} parent=0
    #allocation3 [shape = 'u8[65536]{0}', space=vmem, size = 0x10000, scoped, tag = 'input window, operand 1, single buffered']
    #allocation4 [shape = 's32[1]{0}', space=sflag, size = 0x4, scoped, tag = 'scoped memory for tpu_custom_call.1']
    #allocation5 [shape = 's32[1]{0}', space=sflag, size = 0x4, scoped, tag = 'scoped memory for tpu_custom_call.1']
    #allocation6 [shape = 'u8[4096]{0}', space=vmem, size = 0x1000, scoped, tag = 'output window, operand 0, single buffered']
    %9 = vsyncpa [#allocation4], 0
    %10 = vsyncpa [#allocation5], 0
    // Predicated region
    $region2: #{tpu_custom_call.1} parent=1 // pred_check
      _
    $region3: #{tpu_custom_call.1} parent=1 // pred_check_branch
      %12 = sbr.rel (0) target = $region5
    $region4: #{tpu_custom_call.1} parent=1 // pred_region
      _
    $region5: #{tpu_custom_call.1} parent=1 // pred_fallthru
      _
    // Predicated region
    $region6: #{tpu_custom_call.1} parent=1 // pred_check
      _
    $region7: #{tpu_custom_call.1} parent=1 // pred_check_branch
      %14 = sbr.rel (0) target = $region9
    $region8: #{tpu_custom_call.1} parent=1 // pred_region
      %s16 = ssub.s32 2048, 2048
      %17 = vsyncadd [#allocation4], %s16
      %s18 = sshll.u32 [#allocation3], 4
      %s19 = int_to_ptr.vmem [resolvable:$true] %s18
      %24 = dma.hbm_to_vmem [thread:$0]  %s1, 2048, %s19, [#allocation4], 128, 128, 8
    $region9: #{tpu_custom_call.1} parent=1 // pred_fallthru
      _
    // Predicated region
    $region10: #{tpu_custom_call.1} parent=1 // pred_check
      _
    $region11: #{tpu_custom_call.1} parent=1 // pred_check_branch
      %26 = sbr.rel (0) target = $region13
    $region12: #{tpu_custom_call.1} parent=1 // pred_region
      _
    $region13: #{tpu_custom_call.1} parent=1 // pred_fallthru
      _
    // Predicated region
    $region14: #{tpu_custom_call.1} parent=1 // pred_check
      _
    $region15: #{tpu_custom_call.1} parent=1 // pred_check_branch
      %28 = sbr.rel (0) target = $region17
    $region16: #{tpu_custom_call.1} parent=1 // pred_region
      _
    $region17: #{tpu_custom_call.1} parent=1 // pred_fallthru
      _
    // Predicated region
    $region18: #{tpu_custom_call.1} parent=1 // pred_check
      _
    $region19: #{tpu_custom_call.1} parent=1 // pred_check_branch
      %30 = sbr.rel (0) target = $region21
    $region20: #{tpu_custom_call.1} parent=1 // pred_region
      %31 = dma.done [#allocation4], 2048
    $region21: #{tpu_custom_call.1} parent=1 // pred_fallthru
      _
    %p32 = scmp.eq.s32.totalorder 0, 0
    // Predicated region
    $region22: #{tpu_custom_call.1} parent=1 // pred_check
      %p33 = pneg %p32
    $region23: #{tpu_custom_call.1} parent=1 // pred_check_branch
      %35 = sbr.rel (%p33) target = $region25
    $region24: #{tpu_custom_call.1} parent=1 // pred_region
      %36 = vst [vmem:[#allocation2] sm:$0xff] 0.0
    $region25: #{tpu_custom_call.1} parent=1 // pred_fallthru
      _
    %v37 = vld [vmem:[#allocation2] sm:$0xff]
    %v38 = vld [vmem:[%s0] sm:$0xff]
    %v39 = vld [vmem:[#allocation3] sm:$0xff]
    %v40 = vld [vmem:[#allocation3 + $0x8] sm:$0xff]
    %v41 = vld [vmem:[#allocation3 + $0x10] sm:$0xff]
    %v42 = vld [vmem:[#allocation3 + $0x18] sm:$0xff]
    %v43 = vld [vmem:[#allocation3 + $0x20] sm:$0xff]
    %v44 = vld [vmem:[#allocation3 + $0x28] sm:$0xff]
    %v45 = vld [vmem:[#allocation3 + $0x30] sm:$0xff]
    %v46 = vld [vmem:[#allocation3 + $0x38] sm:$0xff]
    %v47 = vld [vmem:[#allocation3 + $0x40] sm:$0xff]
    %v48 = vld [vmem:[#allocation3 + $0x48] sm:$0xff]
    %v49 = vld [vmem:[#allocation3 + $0x50] sm:$0xff]
    %v50 = vld [vmem:[#allocation3 + $0x58] sm:$0xff]
    %v51 = vld [vmem:[#allocation3 + $0x60] sm:$0xff]
    %v52 = vld [vmem:[#allocation3 + $0x68] sm:$0xff]
    %v53 = vld [vmem:[#allocation3 + $0x70] sm:$0xff]
    %v54 = vld [vmem:[#allocation3 + $0x78] sm:$0xff]
    %55 = vmatprep.subr.mxu0 0.0
    %56 = vmatpush1.xpose.msra.mxu0 %v39
    %57 = vmatprep.subr.mxu0 0.0
    %58 = vmatpush1.xpose.msra.mxu0 %v40
    %59 = vmatprep.subr.mxu0 0.0
    %60 = vmatpush1.xpose.msra.mxu0 %v41
    %61 = vmatprep.subr.mxu0 0.0
    %62 = vmatpush1.xpose.msra.mxu0 %v42
    %63 = vmatprep.subr.mxu0 0.0
    %64 = vmatpush1.xpose.msra.mxu0 %v43
    %65 = vmatprep.subr.mxu0 0.0
    %66 = vmatpush1.xpose.msra.mxu0 %v44
    %67 = vmatprep.subr.mxu0 0.0
    %68 = vmatpush1.xpose.msra.mxu0 %v45
    %69 = vmatprep.subr.mxu0 0.0
    %70 = vmatpush1.xpose.msra.mxu0 %v46
    %71 = vmatprep.subr.mxu0 0.0
    %72 = vmatpush1.xpose.msra.mxu0 %v47
    %73 = vmatprep.subr.mxu0 0.0
    %74 = vmatpush1.xpose.msra.mxu0 %v48
    %75 = vmatprep.subr.mxu0 0.0
    %76 = vmatpush1.xpose.msra.mxu0 %v49
    %77 = vmatprep.subr.mxu0 0.0
    %78 = vmatpush1.xpose.msra.mxu0 %v50
    %79 = vmatprep.subr.mxu0 0.0
    %80 = vmatpush1.xpose.msra.mxu0 %v51
    %81 = vmatprep.subr.mxu0 0.0
    %82 = vmatpush1.xpose.msra.mxu0 %v52
    %83 = vmatprep.subr.mxu0 0.0
    %84 = vmatpush1.xpose.msra.mxu0 %v53
    %85 = vmatprep.subr.mxu0 0.0
    %86 = vmatpush1.xpose.msra.mxu0 %v54
    %87 = vmatprep.subr.mxu0 0.0
    %88 = vmatpush1.xpose.msra.mxu0 0.0
    %89 = vmatprep.subr.mxu0 0.0
    %90 = vmatpush1.xpose.msra.mxu0 0.0
    %91 = vmatprep.subr.mxu0 0.0
    %92 = vmatpush1.xpose.msra.mxu0 0.0
    %93 = vmatprep.subr.mxu0 0.0
    %94 = vmatpush1.xpose.msra.mxu0 0.0
    %95 = vmatprep.subr.mxu0 0.0
    %96 = vmatpush1.xpose.msra.mxu0 0.0
    %97 = vmatprep.subr.mxu0 0.0
    %98 = vmatpush1.xpose.msra.mxu0 0.0
    %99 = vmatprep.subr.mxu0 0.0
    %100 = vmatpush1.xpose.msra.mxu0 0.0
    %101 = vmatprep.subr.mxu0 0.0
    %102 = vmatpush1.xpose.msra.mxu0 0.0
    %103 = vmatprep.subr.mxu0 0.0
    %104 = vmatpush1.xpose.msra.mxu0 0.0
    %105 = vmatprep.subr.mxu0 0.0
    %106 = vmatpush1.xpose.msra.mxu0 0.0
    %107 = vmatprep.subr.mxu0 0.0
    %108 = vmatpush1.xpose.msra.mxu0 0.0
    %109 = vmatprep.subr.mxu0 0.0
    %110 = vmatpush1.xpose.msra.mxu0 0.0
    %111 = vmatprep.subr.mxu0 0.0
    %112 = vmatpush1.xpose.msra.mxu0 0.0
    %113 = vmatprep.subr.mxu0 0.0
    %114 = vmatpush1.xpose.msra.mxu0 0.0
    %115 = vmatprep.subr.mxu0 0.0
    %116 = vmatpush1.xpose.msra.mxu0 0.0
    %117 = vmatprep.subr.mxu0 0.0
    %118 = vmatpush1.xpose.msra.mxu0 0.0
    %119 = vmatprep.mubr.f32.mxu0 0.0
    %120 = vmatmul.mubr.f32.gmra.mrb[0].mxu0 %v38
    %v121 = vpop.f32.mrb[0].mxu0
    %v122 = vadd.f32 0.0, %v121
    %v123 = vpop.f32.mrb[0].mxu0
    %124 = vdwg.mxu0
    %v125 = vadd.f32 %v37, %v122
    %126 = vst [vmem:[#allocation2] sm:$0xff] %v125
    // Predicated region
    $region26: #{tpu_custom_call.1} parent=1 // pred_check
      %p127 = pneg %p32
    $region27: #{tpu_custom_call.1} parent=1 // pred_check_branch
      %129 = sbr.rel (%p127) target = $region29
    $region28: #{tpu_custom_call.1} parent=1 // pred_region
      %v130 = vld [vmem:[#allocation2] sm:$0xff]
      %v131 = vld [vmem:[%s2] sm:$0xff]
      %133 = vset.pattern.permute.xlu0 0
      %134 = vperm.xlu0 %133, %v131
      %v135 = vpop.permute.xlu0 %134
      %v137 = vadd.f32 %v130, %v135
      %v138 = vld [vmem:[%s3] sm:$0x1]
      %v140 = vlaneseq
      %v141 = vshrl.u32 %v140, 7
      %v142 = vsub.s32 0, %v141
      %v143 = vrot.slane %v138, %v142
      %v145 = vadd.f32 %v137, %v143
      %146 = vst [vmem:[#allocation6] sm:$0xff] %v145
    $region29: #{tpu_custom_call.1} parent=1 // pred_fallthru
      _
    // Predicated region
    $region30: #{tpu_custom_call.1} parent=1 // pred_check
      _
    $region31: #{tpu_custom_call.1} parent=1 // pred_check_branch
      %148 = sbr.rel (0) target = $region33
    $region32: #{tpu_custom_call.1} parent=1 // pred_region
      %s150 = ssub.s32 128, 128
      %151 = vsyncadd [#allocation5], %s150
      %s153 = sshll.u32 [#allocation6], 4
      %s154 = int_to_ptr.vmem [resolvable:$true] %s153
      %156 = dma.vmem_to_hbm [thread:$0]  %s154, 128, %s4, [#allocation5]
    $region33: #{tpu_custom_call.1} parent=1 // pred_fallthru
      _
    // Predicated region
    $region34: #{tpu_custom_call.1} parent=1 // pred_check
      _
    $region35: #{tpu_custom_call.1} parent=1 // pred_check_branch
      %158 = sbr.rel (0) target = $region37
    $region36: #{tpu_custom_call.1} parent=1 // pred_region
      %159 = dma.done [#allocation5], 128
    $region37: #{tpu_custom_call.1} parent=1 // pred_fallthru
      _
    %160 = vsyncpa [#allocation4], 1
    %161 = vsyncpa [#allocation5], 1

</llo_original>
